<compile_context>
chip_gen: v6e
topology: v6e:2x2x1
jax: 0.10.0
libtpu: 0.0.40
codegen_flags: <defaults>
</compile_context>

<pallas_src>
import jax
import jax.numpy as jnp
from jax.experimental import pallas as pl
from jax.experimental.pallas import tpu as pltpu


# ---------------------------------------------------------------------------
# Pallas kernel: fused (conv|gate) matmul + InstanceNorm + GLU, B_blk images/step
# ---------------------------------------------------------------------------
def _make_kernel(B_blk, C_out, P_total, P_cols, W_out,
                 r_lo, c_lo, n_rows, n_cols, eps):
    def kernel(patches_ref, w_ref, out_ref):
        w = w_ref[...]                                     # (2*C_out, Kd_pad) f32

        for b in range(B_blk):                             # static unroll, B_blk tiny
            pt = patches_ref[b]                            # (Kd_pad, P_cols) f32

            # One fused MXU matmul for conv + gate branches, f32 accumulate.
            y = jnp.dot(w, pt, preferred_element_type=jnp.float32)  # (2*C_out, P_cols)

            # InstanceNorm statistics over the FULL spatial extent P_total.
            # Real positions outside the valid 10x10 block are all-padding
            # windows whose pre-norm value is exactly 0 (bias cancels under
            # affine=False InstanceNorm); the zero-padded matmul columns behave
            # identically, hence the analytic (P_total - P_cols) correction.
            s1 = jnp.sum(y, axis=-1, keepdims=True)                   # (2*C_out, 1)
            mean = s1 / P_total
            d = y - mean
            ssq = jnp.sum(d * d, axis=-1, keepdims=True)
            var = (ssq + (P_total - P_cols) * mean * mean) / P_total  # biased (PyTorch)
            inv = jax.lax.rsqrt(var + eps)                            # EUP

            yn = d * inv                # normalized valid columns    (2*C_out, P_cols)
            yb = -mean * inv            # normalized zero-window value (2*C_out, 1)

            hn, gn = yn[:C_out], yn[C_out:]
            hb, gb = yb[:C_out], yb[C_out:]

            # Cast once before the stores (bf16 out halves the writeback).
            border = (hb * jax.nn.sigmoid(gb)).astype(out_ref.dtype)  # (C_out, 1)
            valid = (hn * jax.nn.sigmoid(gn)).astype(out_ref.dtype)   # (C_out, P_cols)

            # Lane-dense flat-P output: fill the whole (C_out, P_total) tile with
            # the per-channel border constant, then overwrite the 10x10 valid
            # block row by row (only ~2% of lanes are re-written).
            out_ref[b] = jnp.broadcast_to(border, (C_out, P_total))
            for lr in range(n_rows):
                dst = (r_lo + lr) * W_out + c_lo
                out_ref[b, :, dst:dst + n_cols] = valid[:, lr * n_cols:(lr + 1) * n_cols]

    return kernel


def _images_per_step(N):
    """v7x has 2 TensorCores: keep a batch-parallel grid so each core takes half
    the batch.  Single-TC chips (v5e/v6e): fuse the whole batch into one grid
    step — extra grid steps there are pure serial per-step overhead."""
    try:
        kind = jax.devices()[0].device_kind.lower()
    except Exception:
        kind = ""
    if ("v7" in kind or "tpu7" in kind or "7x" in kind) and N >= 2 and N % 2 == 0:
        return N // 2
    return N


# ---------------------------------------------------------------------------
# Wrapper: NCHW -> tiny 10x10-block im2col (f32) -> pallas_call -> NCHW
# ---------------------------------------------------------------------------
def downsample_block(x, w_conv, b_conv, w_gate, b_gate, *, stride=2, padding=66,
                     eps=1e-5, out_dtype=jnp.bfloat16):
    # Per-channel conv bias is a no-op under InstanceNorm2d(affine=False): it
    # shifts the mean by b and leaves the variance unchanged. Kept for parity.
    del b_conv, b_gate

    N, C_in, H, W = x.shape
    C_out, _, KH, KW = w_conv.shape
    H_out = (H + 2 * padding - KH) // stride + 1
    W_out = (W + 2 * padding - KW) // stride + 1
    P_total = H_out * W_out
    Kdim = C_in * KH * KW

    # Output rows/cols whose receptive field overlaps real (unpadded) input.
    r_lo = max(0, -((-(padding - KH + 1)) // stride))       # ceil((p-k+1)/s)
    r_hi = min(H_out - 1, (H - 1 + padding) // stride)
    c_lo = max(0, -((-(padding - KW + 1)) // stride))
    c_hi = min(W_out - 1, (W - 1 + padding) // stride)
    n_rows = r_hi - r_lo + 1
    n_cols = c_hi - c_lo + 1
    P_valid = n_rows * n_cols

    # Pad x just enough to cover the valid block's receptive field (a few px per
    # side, NOT the full conv padding), then im2col with 25 tiny strided slices.
    row_start = r_lo * stride - padding
    row_end = r_hi * stride - padding + KH - 1
    col_start = c_lo * stride - padding
    col_end = c_hi * stride - padding + KW - 1
    pr_lo, pr_hi = max(0, -row_start), max(0, row_end - (H - 1))
    pc_lo, pc_hi = max(0, -col_start), max(0, col_end - (W - 1))
    xp = jnp.pad(x, ((0, 0), (0, 0), (pr_lo, pr_hi), (pc_lo, pc_hi)))
    rb = row_start + pr_lo
    cb = col_start + pc_lo

    cols = []
    for kh in range(KH):
        for kw in range(KW):
            cols.append(xp[:, :,
                           rb + kh: rb + kh + stride * n_rows: stride,
                           cb + kw: cb + kw + stride * n_cols: stride])
    # (N, C_in, KH*KW, n_rows, n_cols) with (c_in, kh, kw) order matching weights.
    patches = jnp.stack(cols, axis=2).reshape(N, Kdim, P_valid)

    # Pad K and P up to multiples of 128 (clean single-K MXU pass, lane-aligned
    # slabs).  Keep f32 MXU inputs.
    Kd_pad = ((Kdim + 127) // 128) * 128
    P_cols = ((P_valid + 127) // 128) * 128
    patches = jnp.pad(patches, ((0, 0), (0, Kd_pad - Kdim), (0, P_cols - P_valid)))
    patches = patches.astype(jnp.float32)

    # Stack conv + gate weights: one DMA, one matmul.
    w_stacked = jnp.concatenate(
        [w_conv.reshape(C_out, Kdim), w_gate.reshape(C_out, Kdim)], axis=0)
    w_stacked = jnp.pad(w_stacked, ((0, 0), (0, Kd_pad - Kdim))).astype(jnp.float32)

    B_blk = _images_per_step(N)
    if N % B_blk != 0:
        B_blk = 1
    n_steps = N // B_blk

    kernel = _make_kernel(B_blk, C_out, P_total, P_cols, W_out,
                          r_lo, c_lo, n_rows, n_cols, eps)

    out_itemsize = jnp.dtype(out_dtype).itemsize
    cost = pl.CostEstimate(
        flops=2 * N * (2 * C_out) * Kd_pad * P_cols,
        transcendentals=N * 2 * C_out * (P_cols + 1),
        bytes_accessed=(patches.size * 4 + w_stacked.size * 4
                        + N * C_out * P_total * out_itemsize),
    )

    out = pl.pallas_call(
        kernel,
        out_shape=jax.ShapeDtypeStruct((N, C_out, P_total), out_dtype),
        grid_spec=pltpu.PrefetchScalarGridSpec(
            num_scalar_prefetch=0,
            grid=(n_steps,),
            in_specs=[
                pl.BlockSpec((B_blk, Kd_pad, P_cols), lambda n: (n, 0, 0)),
                pl.BlockSpec((2 * C_out, Kd_pad), lambda n: (0, 0)),
            ],
            out_specs=pl.BlockSpec((B_blk, C_out, P_total), lambda n: (n, 0, 0)),
        ),
        compiler_params=pltpu.CompilerParams(dimension_semantics=("parallel",)),
        cost_estimate=cost,
    )(patches, w_stacked)

    # (N, C_out, P) -> NCHW is a free reshape (spatial already last / lane-dense).
    return out.reshape(N, C_out, H_out, W_out)


# ---------------------------------------------------------------------------
# Pure-JAX reference (for a sanity check)
# ---------------------------------------------------------------------------
def downsample_block_ref(x, w_conv, b_conv, w_gate, b_gate, *, stride=2, padding=66,
                         eps=1e-5):
    dn = ("NCHW", "OIHW", "NCHW")

    def conv(w, b):
        y = jax.lax.conv_general_dilated(
            x, w, (stride, stride), [(padding, padding), (padding, padding)],
            dimension_numbers=dn, precision=jax.lax.Precision.HIGHEST)
        return y + b[None, :, None, None]

    def inorm(y):
        m = y.mean(axis=(2, 3), keepdims=True)
        v = jnp.square(y - m).mean(axis=(2, 3), keepdims=True)
        return (y - m) / jnp.sqrt(v + eps)

    h = inorm(conv(w_conv, b_conv))
    g = inorm(conv(w_gate, b_gate))
    return h * jax.nn.sigmoid(g)


if __name__ == "__main__":
    # Shapes consistent with the module: N=2, C_in=4, C_out=8, 16x16 input,
    # k=5, stride=2, padding=66 (module defaults) -> output (2, 8, 72, 72).
    N, C_in, C_out, H, W, K = 2, 4, 8, 16, 16, 5

    key = jax.random.PRNGKey(0)
    kx, k1, k2, k3, k4 = jax.random.split(key, 5)
    x = jax.random.normal(kx, (N, C_in, H, W), dtype=jnp.float32)
    w_conv = 0.1 * jax.random.normal(k1, (C_out, C_in, K, K), dtype=jnp.float32)
    b_conv = 0.1 * jax.random.normal(k2, (C_out,), dtype=jnp.float32)
    w_gate = 0.1 * jax.random.normal(k3, (C_out, C_in, K, K), dtype=jnp.float32)
    b_gate = 0.1 * jax.random.normal(k4, (C_out,), dtype=jnp.float32)

    fwd = jax.jit(downsample_block)
    out = jax.block_until_ready(fwd(x, w_conv, b_conv, w_gate, b_gate))
    ref = jax.block_until_ready(downsample_block_ref(x, w_conv, b_conv, w_gate, b_gate))

    assert out.shape == (N, C_out, 72, 72), out.shape
    # f32 compute end-to-end; only the final store is bf16, so errors are small
    # relative errors on InstanceNorm-amplified values.
    outf = out.astype(jnp.float32)
    err = float(jnp.max(jnp.abs(outf - ref)))
    assert jnp.allclose(outf, ref, atol=5e-2, rtol=5e-2), err

    print("KERNEL_OK")
</pallas_src>

<mosaic_0001>
module attributes {stable_mosaic.version = 11 : i64} {
  func.func @kernel(%arg0: i32, %arg1: memref<2x128x128xf32, #tpu.memory_space<vmem>>, %arg2: memref<16x128xf32, #tpu.memory_space<vmem>>, %arg3: memref<2x8x5184xbf16, #tpu.memory_space<vmem>>) attributes {dimension_semantics = [#tpu.dimension_semantics<parallel>], iteration_bounds = array<i64: 1>, scalar_prefetch = 0 : i64, scratch_operands = 0 : i64, tpu.core_type = #tpu.core_type<tc>, window_params = [{transform_indices = @transform_0, window_bounds = array<i64: 2, 128, 128>}, {pipeline_mode = #tpu.pipeline_mode<synchronous>, transform_indices = @transform_1, window_bounds = array<i64: 16, 128>}, {transform_indices = @transform_2, window_bounds = array<i64: 2, 8, 5184>}]} {
    %c0 = arith.constant 0 : index
    %c0_0 = arith.constant 0 : index
    %0 = vector.load %arg2[%c0, %c0_0] : memref<16x128xf32, #tpu.memory_space<vmem>>, vector<16x128xf32>
    %c0_1 = arith.constant 0 : index
    %c0_2 = arith.constant 0 : index
    %c0_3 = arith.constant 0 : index
    %1 = vector.load %arg1[%c0_1, %c0_2, %c0_3] : memref<2x128x128xf32, #tpu.memory_space<vmem>>, vector<1x128x128xf32>
    %2 = vector.shape_cast %1 : vector<1x128x128xf32> to vector<128x128xf32>
    %cst = arith.constant dense<0.000000e+00> : vector<16x128xf32>
    %3 = tpu.matmul %0, %2, %cst {dimension_numbers = #tpu.dot_dimension_numbers<[1], [0], [0], [1], [0, 0, 1, 1], [], []>} : vector<16x128xf32>, vector<128x128xf32>, vector<16x128xf32> -> vector<16x128xf32>
    %cst_4 = arith.constant dense<0.000000e+00> : vector<16xf32>
    %4 = vector.multi_reduction <add>, %3, %cst_4 [1] : vector<16x128xf32> to vector<16xf32>
    %5 = vector.shape_cast %4 : vector<16xf32> to vector<16x1xf32>
    %cst_5 = arith.constant 5.184000e+03 : f32
    %6 = vector.broadcast %cst_5 : f32 to vector<16x1xf32>
    %7 = arith.divf %5, %6 : vector<16x1xf32>
    %8 = vector.broadcast %7 : vector<16x1xf32> to vector<16x128xf32>
    %9 = arith.subf %3, %8 : vector<16x128xf32>
    %10 = arith.mulf %9, %9 : vector<16x128xf32>
    %cst_6 = arith.constant dense<0.000000e+00> : vector<16xf32>
    %11 = vector.multi_reduction <add>, %10, %cst_6 [1] : vector<16x128xf32> to vector<16xf32>
    %12 = vector.shape_cast %11 : vector<16xf32> to vector<16x1xf32>
    %cst_7 = arith.constant 5.056000e+03 : f32
    %13 = vector.broadcast %cst_7 : f32 to vector<16x1xf32>
    %14 = arith.mulf %13, %7 : vector<16x1xf32>
    %15 = arith.mulf %14, %7 : vector<16x1xf32>
    %16 = arith.addf %12, %15 : vector<16x1xf32>
    %cst_8 = arith.constant 5.184000e+03 : f32
    %17 = vector.broadcast %cst_8 : f32 to vector<16x1xf32>
    %18 = arith.divf %16, %17 : vector<16x1xf32>
    %cst_9 = arith.constant 9.99999974E-6 : f32
    %19 = vector.broadcast %cst_9 : f32 to vector<16x1xf32>
    %20 = arith.addf %18, %19 : vector<16x1xf32>
    %21 = math.rsqrt %20 : vector<16x1xf32>
    %22 = vector.broadcast %21 : vector<16x1xf32> to vector<16x128xf32>
    %23 = arith.mulf %9, %22 : vector<16x128xf32>
    %cst_10 = arith.constant 0.000000e+00 : f32
    %24 = vector.broadcast %cst_10 : f32 to vector<16x1xf32>
    %25 = arith.subf %24, %7 : vector<16x1xf32>
    %26 = arith.mulf %25, %21 : vector<16x1xf32>
    %27 = vector.extract_strided_slice %23 {offsets = [0, 0], sizes = [8, 128], strides = [1, 1]} : vector<16x128xf32> to vector<8x128xf32>
    %28 = vector.extract_strided_slice %23 {offsets = [8, 0], sizes = [8, 128], strides = [1, 1]} : vector<16x128xf32> to vector<8x128xf32>
    %29 = vector.extract_strided_slice %26 {offsets = [0, 0], sizes = [8, 1], strides = [1, 1]} : vector<16x1xf32> to vector<8x1xf32>
    %30 = vector.extract_strided_slice %26 {offsets = [8, 0], sizes = [8, 1], strides = [1, 1]} : vector<16x1xf32> to vector<8x1xf32>
    %31 = arith.negf %30 : vector<8x1xf32>
    %32 = math.exp %31 : vector<8x1xf32>
    %cst_11 = arith.constant 1.000000e+00 : f32
    %33 = vector.broadcast %cst_11 : f32 to vector<8x1xf32>
    %34 = arith.addf %33, %32 : vector<8x1xf32>
    %35 = arith.divf %33, %34 : vector<8x1xf32>
    %36 = arith.mulf %29, %35 : vector<8x1xf32>
    %37 = arith.truncf %36 : vector<8x1xf32> to vector<8x1xbf16>
    %38 = arith.negf %28 : vector<8x128xf32>
    %39 = math.exp %38 : vector<8x128xf32>
    %cst_12 = arith.constant 1.000000e+00 : f32
    %40 = vector.broadcast %cst_12 : f32 to vector<8x128xf32>
    %41 = arith.addf %40, %39 : vector<8x128xf32>
    %42 = arith.divf %40, %41 : vector<8x128xf32>
    %43 = arith.mulf %27, %42 : vector<8x128xf32>
    %44 = arith.truncf %43 : vector<8x128xf32> to vector<8x128xbf16>
    %45 = vector.shape_cast %37 : vector<8x1xbf16> to vector<8x1xbf16>
    %46 = vector.broadcast %45 : vector<8x1xbf16> to vector<8x5184xbf16>
    %c0_13 = arith.constant 0 : index
    %c0_14 = arith.constant 0 : index
    %c0_15 = arith.constant 0 : index
    %47 = vector.load %arg3[%c0_13, %c0_14, %c0_15] : memref<2x8x5184xbf16, #tpu.memory_space<vmem>>, vector<1x8x5184xbf16>
    %48 = vector.shape_cast %47 : vector<1x8x5184xbf16> to vector<8x5184xbf16>
    %49 = vector.shape_cast %46 : vector<8x5184xbf16> to vector<1x8x5184xbf16>
    tpu.vector_store %arg3[%c0_13, %c0_14, %c0_15], %49 {strides = array<i32>} : memref<2x8x5184xbf16, #tpu.memory_space<vmem>>, vector<1x8x5184xbf16>,
    %50 = vector.extract_strided_slice %44 {offsets = [0, 0], sizes = [8, 10], strides = [1, 1]} : vector<8x128xbf16> to vector<8x10xbf16>
    %c0_16 = arith.constant 0 : index
    %c0_17 = arith.constant 0 : index
    %c2263 = arith.constant 2263 : index
    %51 = vector.load %arg3[%c0_16, %c0_17, %c2263] : memref<2x8x5184xbf16, #tpu.memory_space<vmem>>, vector<1x8x10xbf16>
    %52 = vector.shape_cast %51 : vector<1x8x10xbf16> to vector<8x10xbf16>
    %53 = vector.shape_cast %50 : vector<8x10xbf16> to vector<1x8x10xbf16>
    tpu.vector_store %arg3[%c0_16, %c0_17, %c2263], %53 {strides = array<i32>} : memref<2x8x5184xbf16, #tpu.memory_space<vmem>>, vector<1x8x10xbf16>,
    %54 = vector.extract_strided_slice %44 {offsets = [0, 10], sizes = [8, 10], strides = [1, 1]} : vector<8x128xbf16> to vector<8x10xbf16>
    %c0_18 = arith.constant 0 : index
    %c0_19 = arith.constant 0 : index
    %c2335 = arith.constant 2335 : index
    %55 = vector.load %arg3[%c0_18, %c0_19, %c2335] : memref<2x8x5184xbf16, #tpu.memory_space<vmem>>, vector<1x8x10xbf16>
    %56 = vector.shape_cast %55 : vector<1x8x10xbf16> to vector<8x10xbf16>
    %57 = vector.shape_cast %54 : vector<8x10xbf16> to vector<1x8x10xbf16>
    tpu.vector_store %arg3[%c0_18, %c0_19, %c2335], %57 {strides = array<i32>} : memref<2x8x5184xbf16, #tpu.memory_space<vmem>>, vector<1x8x10xbf16>,
    %58 = vector.extract_strided_slice %44 {offsets = [0, 20], sizes = [8, 10], strides = [1, 1]} : vector<8x128xbf16> to vector<8x10xbf16>
    %c0_20 = arith.constant 0 : index
    %c0_21 = arith.constant 0 : index
    %c2407 = arith.constant 2407 : index
    %59 = vector.load %arg3[%c0_20, %c0_21, %c2407] : memref<2x8x5184xbf16, #tpu.memory_space<vmem>>, vector<1x8x10xbf16>
    %60 = vector.shape_cast %59 : vector<1x8x10xbf16> to vector<8x10xbf16>
    %61 = vector.shape_cast %58 : vector<8x10xbf16> to vector<1x8x10xbf16>
    tpu.vector_store %arg3[%c0_20, %c0_21, %c2407], %61 {strides = array<i32>} : memref<2x8x5184xbf16, #tpu.memory_space<vmem>>, vector<1x8x10xbf16>,
    %62 = vector.extract_strided_slice %44 {offsets = [0, 30], sizes = [8, 10], strides = [1, 1]} : vector<8x128xbf16> to vector<8x10xbf16>
    %c0_22 = arith.constant 0 : index
    %c0_23 = arith.constant 0 : index
    %c2479 = arith.constant 2479 : index
    %63 = vector.load %arg3[%c0_22, %c0_23, %c2479] : memref<2x8x5184xbf16, #tpu.memory_space<vmem>>, vector<1x8x10xbf16>
    %64 = vector.shape_cast %63 : vector<1x8x10xbf16> to vector<8x10xbf16>
    %65 = vector.shape_cast %62 : vector<8x10xbf16> to vector<1x8x10xbf16>
    tpu.vector_store %arg3[%c0_22, %c0_23, %c2479], %65 {strides = array<i32>} : memref<2x8x5184xbf16, #tpu.memory_space<vmem>>, vector<1x8x10xbf16>,
    %66 = vector.extract_strided_slice %44 {offsets = [0, 40], sizes = [8, 10], strides = [1, 1]} : vector<8x128xbf16> to vector<8x10xbf16>
    %c0_24 = arith.constant 0 : index
    %c0_25 = arith.constant 0 : index
    %c2551 = arith.constant 2551 : index
    %67 = vector.load %arg3[%c0_24, %c0_25, %c2551] : memref<2x8x5184xbf16, #tpu.memory_space<vmem>>, vector<1x8x10xbf16>
    %68 = vector.shape_cast %67 : vector<1x8x10xbf16> to vector<8x10xbf16>
    %69 = vector.shape_cast %66 : vector<8x10xbf16> to vector<1x8x10xbf16>
    tpu.vector_store %arg3[%c0_24, %c0_25, %c2551], %69 {strides = array<i32>} : memref<2x8x5184xbf16, #tpu.memory_space<vmem>>, vector<1x8x10xbf16>,
    %70 = vector.extract_strided_slice %44 {offsets = [0, 50], sizes = [8, 10], strides = [1, 1]} : vector<8x128xbf16> to vector<8x10xbf16>
    %c0_26 = arith.constant 0 : index
    %c0_27 = arith.constant 0 : index
    %c2623 = arith.constant 2623 : index
    %71 = vector.load %arg3[%c0_26, %c0_27, %c2623] : memref<2x8x5184xbf16, #tpu.memory_space<vmem>>, vector<1x8x10xbf16>
    %72 = vector.shape_cast %71 : vector<1x8x10xbf16> to vector<8x10xbf16>
    %73 = vector.shape_cast %70 : vector<8x10xbf16> to vector<1x8x10xbf16>
    tpu.vector_store %arg3[%c0_26, %c0_27, %c2623], %73 {strides = array<i32>} : memref<2x8x5184xbf16, #tpu.memory_space<vmem>>, vector<1x8x10xbf16>,
    %74 = vector.extract_strided_slice %44 {offsets = [0, 60], sizes = [8, 10], strides = [1, 1]} : vector<8x128xbf16> to vector<8x10xbf16>
    %c0_28 = arith.constant 0 : index
    %c0_29 = arith.constant 0 : index
    %c2695 = arith.constant 2695 : index
    %75 = vector.load %arg3[%c0_28, %c0_29, %c2695] : memref<2x8x5184xbf16, #tpu.memory_space<vmem>>, vector<1x8x10xbf16>
    %76 = vector.shape_cast %75 : vector<1x8x10xbf16> to vector<8x10xbf16>
    %77 = vector.shape_cast %74 : vector<8x10xbf16> to vector<1x8x10xbf16>
    tpu.vector_store %arg3[%c0_28, %c0_29, %c2695], %77 {strides = array<i32>} : memref<2x8x5184xbf16, #tpu.memory_space<vmem>>, vector<1x8x10xbf16>,
    %78 = vector.extract_strided_slice %44 {offsets = [0, 70], sizes = [8, 10], strides = [1, 1]} : vector<8x128xbf16> to vector<8x10xbf16>
    %c0_30 = arith.constant 0 : index
    %c0_31 = arith.constant 0 : index
    %c2767 = arith.constant 2767 : index
    %79 = vector.load %arg3[%c0_30, %c0_31, %c2767] : memref<2x8x5184xbf16, #tpu.memory_space<vmem>>, vector<1x8x10xbf16>
    %80 = vector.shape_cast %79 : vector<1x8x10xbf16> to vector<8x10xbf16>
    %81 = vector.shape_cast %78 : vector<8x10xbf16> to vector<1x8x10xbf16>
    tpu.vector_store %arg3[%c0_30, %c0_31, %c2767], %81 {strides = array<i32>} : memref<2x8x5184xbf16, #tpu.memory_space<vmem>>, vector<1x8x10xbf16>,
    %82 = vector.extract_strided_slice %44 {offsets = [0, 80], sizes = [8, 10], strides = [1, 1]} : vector<8x128xbf16> to vector<8x10xbf16>
    %c0_32 = arith.constant 0 : index
    %c0_33 = arith.constant 0 : index
    %c2839 = arith.constant 2839 : index
    %83 = vector.load %arg3[%c0_32, %c0_33, %c2839] : memref<2x8x5184xbf16, #tpu.memory_space<vmem>>, vector<1x8x10xbf16>
    %84 = vector.shape_cast %83 : vector<1x8x10xbf16> to vector<8x10xbf16>
    %85 = vector.shape_cast %82 : vector<8x10xbf16> to vector<1x8x10xbf16>
    tpu.vector_store %arg3[%c0_32, %c0_33, %c2839], %85 {strides = array<i32>} : memref<2x8x5184xbf16, #tpu.memory_space<vmem>>, vector<1x8x10xbf16>,
    %86 = vector.extract_strided_slice %44 {offsets = [0, 90], sizes = [8, 10], strides = [1, 1]} : vector<8x128xbf16> to vector<8x10xbf16>
    %c0_34 = arith.constant 0 : index
    %c0_35 = arith.constant 0 : index
    %c2911 = arith.constant 2911 : index
    %87 = vector.load %arg3[%c0_34, %c0_35, %c2911] : memref<2x8x5184xbf16, #tpu.memory_space<vmem>>, vector<1x8x10xbf16>
    %88 = vector.shape_cast %87 : vector<1x8x10xbf16> to vector<8x10xbf16>
    %89 = vector.shape_cast %86 : vector<8x10xbf16> to vector<1x8x10xbf16>
    tpu.vector_store %arg3[%c0_34, %c0_35, %c2911], %89 {strides = array<i32>} : memref<2x8x5184xbf16, #tpu.memory_space<vmem>>, vector<1x8x10xbf16>,
    %c1 = arith.constant 1 : index
    %c0_36 = arith.constant 0 : index
    %c0_37 = arith.constant 0 : index
    %90 = vector.load %arg1[%c1, %c0_36, %c0_37] : memref<2x128x128xf32, #tpu.memory_space<vmem>>, vector<1x128x128xf32>
    %91 = vector.shape_cast %90 : vector<1x128x128xf32> to vector<128x128xf32>
    %cst_38 = arith.constant dense<0.000000e+00> : vector<16x128xf32>
    %92 = tpu.matmul %0, %91, %cst_38 {dimension_numbers = #tpu.dot_dimension_numbers<[1], [0], [0], [1], [0, 0, 1, 1], [], []>} : vector<16x128xf32>, vector<128x128xf32>, vector<16x128xf32> -> vector<16x128xf32>
    %cst_39 = arith.constant dense<0.000000e+00> : vector<16xf32>
    %93 = vector.multi_reduction <add>, %92, %cst_39 [1] : vector<16x128xf32> to vector<16xf32>
    %94 = vector.shape_cast %93 : vector<16xf32> to vector<16x1xf32>
    %cst_40 = arith.constant 5.184000e+03 : f32
    %95 = vector.broadcast %cst_40 : f32 to vector<16x1xf32>
    %96 = arith.divf %94, %95 : vector<16x1xf32>
    %97 = vector.broadcast %96 : vector<16x1xf32> to vector<16x128xf32>
    %98 = arith.subf %92, %97 : vector<16x128xf32>
    %99 = arith.mulf %98, %98 : vector<16x128xf32>
    %cst_41 = arith.constant dense<0.000000e+00> : vector<16xf32>
    %100 = vector.multi_reduction <add>, %99, %cst_41 [1] : vector<16x128xf32> to vector<16xf32>
    %101 = vector.shape_cast %100 : vector<16xf32> to vector<16x1xf32>
    %cst_42 = arith.constant 5.056000e+03 : f32
    %102 = vector.broadcast %cst_42 : f32 to vector<16x1xf32>
    %103 = arith.mulf %102, %96 : vector<16x1xf32>
    %104 = arith.mulf %103, %96 : vector<16x1xf32>
    %105 = arith.addf %101, %104 : vector<16x1xf32>
    %cst_43 = arith.constant 5.184000e+03 : f32
    %106 = vector.broadcast %cst_43 : f32 to vector<16x1xf32>
    %107 = arith.divf %105, %106 : vector<16x1xf32>
    %cst_44 = arith.constant 9.99999974E-6 : f32
    %108 = vector.broadcast %cst_44 : f32 to vector<16x1xf32>
    %109 = arith.addf %107, %108 : vector<16x1xf32>
    %110 = math.rsqrt %109 : vector<16x1xf32>
    %111 = vector.broadcast %110 : vector<16x1xf32> to vector<16x128xf32>
    %112 = arith.mulf %98, %111 : vector<16x128xf32>
    %cst_45 = arith.constant 0.000000e+00 : f32
    %113 = vector.broadcast %cst_45 : f32 to vector<16x1xf32>
    %114 = arith.subf %113, %96 : vector<16x1xf32>
    %115 = arith.mulf %114, %110 : vector<16x1xf32>
    %116 = vector.extract_strided_slice %112 {offsets = [0, 0], sizes = [8, 128], strides = [1, 1]} : vector<16x128xf32> to vector<8x128xf32>
    %117 = vector.extract_strided_slice %112 {offsets = [8, 0], sizes = [8, 128], strides = [1, 1]} : vector<16x128xf32> to vector<8x128xf32>
    %118 = vector.extract_strided_slice %115 {offsets = [0, 0], sizes = [8, 1], strides = [1, 1]} : vector<16x1xf32> to vector<8x1xf32>
    %119 = vector.extract_strided_slice %115 {offsets = [8, 0], sizes = [8, 1], strides = [1, 1]} : vector<16x1xf32> to vector<8x1xf32>
    %120 = arith.negf %119 : vector<8x1xf32>
    %121 = math.exp %120 : vector<8x1xf32>
    %cst_46 = arith.constant 1.000000e+00 : f32
    %122 = vector.broadcast %cst_46 : f32 to vector<8x1xf32>
    %123 = arith.addf %122, %121 : vector<8x1xf32>
    %124 = arith.divf %122, %123 : vector<8x1xf32>
    %125 = arith.mulf %118, %124 : vector<8x1xf32>
    %126 = arith.truncf %125 : vector<8x1xf32> to vector<8x1xbf16>
    %127 = arith.negf %117 : vector<8x128xf32>
    %128 = math.exp %127 : vector<8x128xf32>
    %cst_47 = arith.constant 1.000000e+00 : f32
    %129 = vector.broadcast %cst_47 : f32 to vector<8x128xf32>
    %130 = arith.addf %129, %128 : vector<8x128xf32>
    %131 = arith.divf %129, %130 : vector<8x128xf32>
    %132 = arith.mulf %116, %131 : vector<8x128xf32>
    %133 = arith.truncf %132 : vector<8x128xf32> to vector<8x128xbf16>
    %134 = vector.shape_cast %126 : vector<8x1xbf16> to vector<8x1xbf16>
    %135 = vector.broadcast %134 : vector<8x1xbf16> to vector<8x5184xbf16>
    %c1_48 = arith.constant 1 : index
    %c0_49 = arith.constant 0 : index
    %c0_50 = arith.constant 0 : index
    %136 = vector.load %arg3[%c1_48, %c0_49, %c0_50] : memref<2x8x5184xbf16, #tpu.memory_space<vmem>>, vector<1x8x5184xbf16>
    %137 = vector.shape_cast %136 : vector<1x8x5184xbf16> to vector<8x5184xbf16>
    %138 = vector.shape_cast %135 : vector<8x5184xbf16> to vector<1x8x5184xbf16>
    tpu.vector_store %arg3[%c1_48, %c0_49, %c0_50], %138 {strides = array<i32>} : memref<2x8x5184xbf16, #tpu.memory_space<vmem>>, vector<1x8x5184xbf16>,
    %139 = vector.extract_strided_slice %133 {offsets = [0, 0], sizes = [8, 10], strides = [1, 1]} : vector<8x128xbf16> to vector<8x10xbf16>
    %c1_51 = arith.constant 1 : index
    %c0_52 = arith.constant 0 : index
    %c2263_53 = arith.constant 2263 : index
    %140 = vector.load %arg3[%c1_51, %c0_52, %c2263_53] : memref<2x8x5184xbf16, #tpu.memory_space<vmem>>, vector<1x8x10xbf16>
    %141 = vector.shape_cast %140 : vector<1x8x10xbf16> to vector<8x10xbf16>
    %142 = vector.shape_cast %139 : vector<8x10xbf16> to vector<1x8x10xbf16>
    tpu.vector_store %arg3[%c1_51, %c0_52, %c2263_53], %142 {strides = array<i32>} : memref<2x8x5184xbf16, #tpu.memory_space<vmem>>, vector<1x8x10xbf16>,
    %143 = vector.extract_strided_slice %133 {offsets = [0, 10], sizes = [8, 10], strides = [1, 1]} : vector<8x128xbf16> to vector<8x10xbf16>
    %c1_54 = arith.constant 1 : index
    %c0_55 = arith.constant 0 : index
    %c2335_56 = arith.constant 2335 : index
    %144 = vector.load %arg3[%c1_54, %c0_55, %c2335_56] : memref<2x8x5184xbf16, #tpu.memory_space<vmem>>, vector<1x8x10xbf16>
    %145 = vector.shape_cast %144 : vector<1x8x10xbf16> to vector<8x10xbf16>
    %146 = vector.shape_cast %143 : vector<8x10xbf16> to vector<1x8x10xbf16>
    tpu.vector_store %arg3[%c1_54, %c0_55, %c2335_56], %146 {strides = array<i32>} : memref<2x8x5184xbf16, #tpu.memory_space<vmem>>, vector<1x8x10xbf16>,
    %147 = vector.extract_strided_slice %133 {offsets = [0, 20], sizes = [8, 10], strides = [1, 1]} : vector<8x128xbf16> to vector<8x10xbf16>
    %c1_57 = arith.constant 1 : index
    %c0_58 = arith.constant 0 : index
    %c2407_59 = arith.constant 2407 : index
    %148 = vector.load %arg3[%c1_57, %c0_58, %c2407_59] : memref<2x8x5184xbf16, #tpu.memory_space<vmem>>, vector<1x8x10xbf16>
    %149 = vector.shape_cast %148 : vector<1x8x10xbf16> to vector<8x10xbf16>
    %150 = vector.shape_cast %147 : vector<8x10xbf16> to vector<1x8x10xbf16>
    tpu.vector_store %arg3[%c1_57, %c0_58, %c2407_59], %150 {strides = array<i32>} : memref<2x8x5184xbf16, #tpu.memory_space<vmem>>, vector<1x8x10xbf16>,
    %151 = vector.extract_strided_slice %133 {offsets = [0, 30], sizes = [8, 10], strides = [1, 1]} : vector<8x128xbf16> to vector<8x10xbf16>
    %c1_60 = arith.constant 1 : index
    %c0_61 = arith.constant 0 : index
    %c2479_62 = arith.constant 2479 : index
    %152 = vector.load %arg3[%c1_60, %c0_61, %c2479_62] : memref<2x8x5184xbf16, #tpu.memory_space<vmem>>, vector<1x8x10xbf16>
    %153 = vector.shape_cast %152 : vector<1x8x10xbf16> to vector<8x10xbf16>
    %154 = vector.shape_cast %151 : vector<8x10xbf16> to vector<1x8x10xbf16>
    tpu.vector_store %arg3[%c1_60, %c0_61, %c2479_62], %154 {strides = array<i32>} : memref<2x8x5184xbf16, #tpu.memory_space<vmem>>, vector<1x8x10xbf16>,
    %155 = vector.extract_strided_slice %133 {offsets = [0, 40], sizes = [8, 10], strides = [1, 1]} : vector<8x128xbf16> to vector<8x10xbf16>
    %c1_63 = arith.constant 1 : index
    %c0_64 = arith.constant 0 : index
    %c2551_65 = arith.constant 2551 : index
    %156 = vector.load %arg3[%c1_63, %c0_64, %c2551_65] : memref<2x8x5184xbf16, #tpu.memory_space<vmem>>, vector<1x8x10xbf16>
    %157 = vector.shape_cast %156 : vector<1x8x10xbf16> to vector<8x10xbf16>
    %158 = vector.shape_cast %155 : vector<8x10xbf16> to vector<1x8x10xbf16>
    tpu.vector_store %arg3[%c1_63, %c0_64, %c2551_65], %158 {strides = array<i32>} : memref<2x8x5184xbf16, #tpu.memory_space<vmem>>, vector<1x8x10xbf16>,
    %159 = vector.extract_strided_slice %133 {offsets = [0, 50], sizes = [8, 10], strides = [1, 1]} : vector<8x128xbf16> to vector<8x10xbf16>
    %c1_66 = arith.constant 1 : index
    %c0_67 = arith.constant 0 : index
    %c2623_68 = arith.constant 2623 : index
    %160 = vector.load %arg3[%c1_66, %c0_67, %c2623_68] : memref<2x8x5184xbf16, #tpu.memory_space<vmem>>, vector<1x8x10xbf16>
    %161 = vector.shape_cast %160 : vector<1x8x10xbf16> to vector<8x10xbf16>
    %162 = vector.shape_cast %159 : vector<8x10xbf16> to vector<1x8x10xbf16>
    tpu.vector_store %arg3[%c1_66, %c0_67, %c2623_68], %162 {strides = array<i32>} : memref<2x8x5184xbf16, #tpu.memory_space<vmem>>, vector<1x8x10xbf16>,
    %163 = vector.extract_strided_slice %133 {offsets = [0, 60], sizes = [8, 10], strides = [1, 1]} : vector<8x128xbf16> to vector<8x10xbf16>
    %c1_69 = arith.constant 1 : index
    %c0_70 = arith.constant 0 : index
    %c2695_71 = arith.constant 2695 : index
    %164 = vector.load %arg3[%c1_69, %c0_70, %c2695_71] : memref<2x8x5184xbf16, #tpu.memory_space<vmem>>, vector<1x8x10xbf16>
    %165 = vector.shape_cast %164 : vector<1x8x10xbf16> to vector<8x10xbf16>
    %166 = vector.shape_cast %163 : vector<8x10xbf16> to vector<1x8x10xbf16>
    tpu.vector_store %arg3[%c1_69, %c0_70, %c2695_71], %166 {strides = array<i32>} : memref<2x8x5184xbf16, #tpu.memory_space<vmem>>, vector<1x8x10xbf16>,
    %167 = vector.extract_strided_slice %133 {offsets = [0, 70], sizes = [8, 10], strides = [1, 1]} : vector<8x128xbf16> to vector<8x10xbf16>
    %c1_72 = arith.constant 1 : index
    %c0_73 = arith.constant 0 : index
    %c2767_74 = arith.constant 2767 : index
    %168 = vector.load %arg3[%c1_72, %c0_73, %c2767_74] : memref<2x8x5184xbf16, #tpu.memory_space<vmem>>, vector<1x8x10xbf16>
    %169 = vector.shape_cast %168 : vector<1x8x10xbf16> to vector<8x10xbf16>
    %170 = vector.shape_cast %167 : vector<8x10xbf16> to vector<1x8x10xbf16>
    tpu.vector_store %arg3[%c1_72, %c0_73, %c2767_74], %170 {strides = array<i32>} : memref<2x8x5184xbf16, #tpu.memory_space<vmem>>, vector<1x8x10xbf16>,
    %171 = vector.extract_strided_slice %133 {offsets = [0, 80], sizes = [8, 10], strides = [1, 1]} : vector<8x128xbf16> to vector<8x10xbf16>
    %c1_75 = arith.constant 1 : index
    %c0_76 = arith.constant 0 : index
    %c2839_77 = arith.constant 2839 : index
    %172 = vector.load %arg3[%c1_75, %c0_76, %c2839_77] : memref<2x8x5184xbf16, #tpu.memory_space<vmem>>, vector<1x8x10xbf16>
    %173 = vector.shape_cast %172 : vector<1x8x10xbf16> to vector<8x10xbf16>
    %174 = vector.shape_cast %171 : vector<8x10xbf16> to vector<1x8x10xbf16>
    tpu.vector_store %arg3[%c1_75, %c0_76, %c2839_77], %174 {strides = array<i32>} : memref<2x8x5184xbf16, #tpu.memory_space<vmem>>, vector<1x8x10xbf16>,
    %175 = vector.extract_strided_slice %133 {offsets = [0, 90], sizes = [8, 10], strides = [1, 1]} : vector<8x128xbf16> to vector<8x10xbf16>
    %c1_78 = arith.constant 1 : index
    %c0_79 = arith.constant 0 : index
    %c2911_80 = arith.constant 2911 : index
    %176 = vector.load %arg3[%c1_78, %c0_79, %c2911_80] : memref<2x8x5184xbf16, #tpu.memory_space<vmem>>, vector<1x8x10xbf16>
    %177 = vector.shape_cast %176 : vector<1x8x10xbf16> to vector<8x10xbf16>
    %178 = vector.shape_cast %175 : vector<8x10xbf16> to vector<1x8x10xbf16>
    tpu.vector_store %arg3[%c1_78, %c0_79, %c2911_80], %178 {strides = array<i32>} : memref<2x8x5184xbf16, #tpu.memory_space<vmem>>, vector<1x8x10xbf16>,
    return
  }
  func.func @transform_0(%arg0: i32) -> (i32, i32, i32) {
    %c0_i32 = arith.constant 0 : i32
    %c0_i32_0 = arith.constant 0 : i32
    %c0_i32_1 = arith.constant 0 : i32
    return %arg0, %c0_i32, %c0_i32_0 : i32, i32, i32
  }
  func.func @transform_1(%arg0: i32) -> (i32, i32) {
    %c0_i32 = arith.constant 0 : i32
    %c0_i32_0 = arith.constant 0 : i32
    %c0_i32_1 = arith.constant 0 : i32
    return %c0_i32, %c0_i32_0 : i32, i32
  }
  func.func @transform_2(%arg0: i32) -> (i32, i32, i32) {
    %c0_i32 = arith.constant 0 : i32
    %c0_i32_0 = arith.constant 0 : i32
    %c0_i32_1 = arith.constant 0 : i32
    return %arg0, %c0_i32, %c0_i32_0 : i32, i32, i32
  }
}

</mosaic_0001>

<llo_original>
// kernel: downsample_block.1
$region0: #{downsample_block.1}
  #allocation0 [shape = 'u32[]', space=smem, size = 0x4, offset = 0x4, fixed_abs, tag = 'smem constant byte address 0x4 - core index']
  #allocation1 [shape = 'u32[144,128]{1,0:T(1,128)}', space=vmem, size = 0x12000, scoped, tag = 'internal scratch']
  %s0 = inlined_call_operand.vmem [shape: f32[2,128,128], index: 0, kind: input, shape index: {}]
  %s1 = inlined_call_operand.vmem [shape: f32[16,128], index: 1, kind: input, shape index: {}]
  %s2 = inlined_call_operand.vmem [shape: bf16[2,8,5184], index: 2, kind: output, shape index: {}]
  %s3 = sld [smem:[#allocation0]]
  $region18: #{downsample_block.1} parent=0
    _
  %s5 = ssub.s32 1, %s3
  %s6 = scalar_select 0, %s5, %s3
  // Predicated region
  $region2: #{downsample_block.1} parent=0 // pred_check
    _
  $region3: #{downsample_block.1} parent=0 // pred_check_branch
    %8 = sbr.rel (0) target = $region5
  $region4: #{downsample_block.1} parent=0 // pred_region
    _
  $region5: #{downsample_block.1} parent=0 // pred_fallthru
    _
  // Predicated region
  $region6: #{downsample_block.1} parent=0 // pred_check
    _
  $region7: #{downsample_block.1} parent=0 // pred_check_branch
    %10 = sbr.rel (0) target = $region9
  $region8: #{downsample_block.1} parent=0 // pred_region
    _
  $region9: #{downsample_block.1} parent=0 // pred_fallthru
    _
  %v11 = vld [vmem:[%s1] sm:$0xff]
  %v12 = vld [vmem:[%s1 + $0x8] sm:$0xff]
  %v13 = vld [vmem:[%s0] sm:$0xff]
  %v14 = vld [vmem:[%s0 + $0x8] sm:$0xff]
  %v15 = vld [vmem:[%s0 + $0x10] sm:$0xff]
  %v16 = vld [vmem:[%s0 + $0x18] sm:$0xff]
  %v17 = vld [vmem:[%s0 + $0x20] sm:$0xff]
  %v18 = vld [vmem:[%s0 + $0x28] sm:$0xff]
  %v19 = vld [vmem:[%s0 + $0x30] sm:$0xff]
  %v20 = vld [vmem:[%s0 + $0x38] sm:$0xff]
  %v21 = vld [vmem:[%s0 + $0x40] sm:$0xff]
  %v22 = vld [vmem:[%s0 + $0x48] sm:$0xff]
  %v23 = vld [vmem:[%s0 + $0x50] sm:$0xff]
  %v24 = vld [vmem:[%s0 + $0x58] sm:$0xff]
  %v25 = vld [vmem:[%s0 + $0x60] sm:$0xff]
  %v26 = vld [vmem:[%s0 + $0x68] sm:$0xff]
  %v27 = vld [vmem:[%s0 + $0x70] sm:$0xff]
  %v28 = vld [vmem:[%s0 + $0x78] sm:$0xff]
  %29 = vmatprep.subr.mxu0 0.0
  %30 = vmatpush1.msra.mxu0 %v28
  %31 = vmatprep.subr.mxu0 0.0
  %32 = vmatpush1.msra.mxu0 %v27
  %33 = vmatprep.subr.mxu0 0.0
  %34 = vmatpush1.msra.mxu0 %v26
  %35 = vmatprep.subr.mxu0 0.0
  %36 = vmatpush1.msra.mxu0 %v25
  %37 = vmatprep.subr.mxu0 0.0
  %38 = vmatpush1.msra.mxu0 %v24
  %39 = vmatprep.subr.mxu0 0.0
  %40 = vmatpush1.msra.mxu0 %v23
  %41 = vmatprep.subr.mxu0 0.0
  %42 = vmatpush1.msra.mxu0 %v22
  %43 = vmatprep.subr.mxu0 0.0
  %44 = vmatpush1.msra.mxu0 %v21
  %45 = vmatprep.subr.mxu0 0.0
  %46 = vmatpush1.msra.mxu0 %v20
  %47 = vmatprep.subr.mxu0 0.0
  %48 = vmatpush1.msra.mxu0 %v19
  %49 = vmatprep.subr.mxu0 0.0
  %50 = vmatpush1.msra.mxu0 %v18
  %51 = vmatprep.subr.mxu0 0.0
  %52 = vmatpush1.msra.mxu0 %v17
  %53 = vmatprep.subr.mxu0 0.0
  %54 = vmatpush1.msra.mxu0 %v16
  %55 = vmatprep.subr.mxu0 0.0
  %56 = vmatpush1.msra.mxu0 %v15
  %57 = vmatprep.subr.mxu0 0.0
  %58 = vmatpush1.msra.mxu0 %v14
  %59 = vmatprep.subr.mxu0 0.0
  %60 = vmatpush1.msra.mxu0 %v13
  %61 = vmatprep.subr.mxu0 0.0
  %62 = vmatpush2.msra.mxu0 0.0
  %63 = vmatprep.subr.mxu0 0.0
  %64 = vmatpush2.msra.mxu0 0.0
  %65 = vmatprep.subr.mxu0 0.0
  %66 = vmatpush2.msra.mxu0 0.0
  %67 = vmatprep.subr.mxu0 0.0
  %68 = vmatpush2.msra.mxu0 0.0
  %69 = vmatprep.subr.mxu0 0.0
  %70 = vmatpush2.msra.mxu0 0.0
  %71 = vmatprep.subr.mxu0 0.0
  %72 = vmatpush2.msra.mxu0 0.0
  %73 = vmatprep.subr.mxu0 0.0
  %74 = vmatpush2.msra.mxu0 0.0
  %75 = vmatprep.subr.mxu0 0.0
  %76 = vmatpush2.msra.mxu0 0.0
  %77 = vmatprep.subr.mxu0 0.0
  %78 = vmatpush2.msra.mxu0 0.0
  %79 = vmatprep.subr.mxu0 0.0
  %80 = vmatpush2.msra.mxu0 0.0
  %81 = vmatprep.subr.mxu0 0.0
  %82 = vmatpush2.msra.mxu0 0.0
  %83 = vmatprep.subr.mxu0 0.0
  %84 = vmatpush2.msra.mxu0 0.0
  %85 = vmatprep.subr.mxu0 0.0
  %86 = vmatpush2.msra.mxu0 0.0
  %87 = vmatprep.subr.mxu0 0.0
  %88 = vmatpush2.msra.mxu0 0.0
  %89 = vmatprep.subr.mxu0 0.0
  %90 = vmatpush2.msra.mxu0 0.0
  %91 = vmatprep.subr.mxu0 0.0
  %92 = vmatpush2.msra.mxu0 0.0
  %93 = vmatprep.mubr.f32.mxu0 0.0
  %94 = vmatmul.mubr.f32.gmra.mxu0 %v11
  %v95 = vpop.f32.mrf.mxu0
  %v96 = vadd.f32 0.0, %v95
  %v97 = vpop.f32.mrf.mxu0
  %98 = vmatprep.mubr.f32.mxu0 0.0
  %99 = vmatmul.mubr.f32.gmra.mxu0 %v12
  %v100 = vpop.f32.mrf.mxu0
  %v101 = vadd.f32 0.0, %v100
  %v102 = vpop.f32.mrf.mxu0
  %103 = vdwg.mxu0
  %104 = vadd.xlane.f32.xlu0 %v96
  %v105 = vpop.xlane.xlu0 %104
  %106 = vadd.xlane.f32.xlu0 %v101
  %v107 = vpop.xlane.xlu0 %106
  %v108 = vrcp.pop 5184.0
  %v109 = vmul.f32 %v105, %v108
  %v110 = vmul.f32 %v107, %v108
  %v111 = vsub.f32 %v96, %v109
  %v112 = vsub.f32 %v101, %v110
  %v113 = vmul.f32 %v111, %v111
  %v114 = vmul.f32 %v112, %v112
  %115 = vadd.xlane.f32.xlu0 %v113
  %v116 = vpop.xlane.xlu0 %115
  %117 = vadd.xlane.f32.xlu0 %v114
  %v118 = vpop.xlane.xlu0 %117
  %v119 = vmul.f32 %v109, 5056.0
  %v120 = vmul.f32 %v110, 5056.0
  %v121 = vmul.f32 %v119, %v109
  %v122 = vmul.f32 %v120, %v110
  %v123 = vadd.f32 %v116, %v121
  %v124 = vadd.f32 %v118, %v122
  %v125 = vmul.f32 %v123, %v108
  %v126 = vmul.f32 %v124, %v108
  %v127 = vadd.f32 %v125, 1e-05
  %v128 = vadd.f32 %v126, 1e-05
  %v129 = vrsqrt.pop %v127
  %v130 = vrsqrt.pop %v128
  %v131 = vmul.f32 %v111, %v129
  %v132 = vmul.f32 %v112, %v130
  %v133 = vsub.f32 0.0, %v109
  %v134 = vsub.f32 0.0, %v110
  %v135 = vmul.f32 %v133, %v129
  %v136 = vmul.f32 %v134, %v130
  %v137 = vxor.u32 %v136, 2147483648
  %v138 = vmul.f32 %v137, 1.442695
  %v139 = vpow.pop %v138
  %v140 = vadd.f32 %v139, 1.0
  %v141 = vrcp.pop %v140
  %v142 = vmul.f32 1.0, %v141
  %v143 = vmul.f32 %v135, %v142
  %v144 = vpack.c.bf16 %v143, %v143
  %v145 = vxor.u32 %v132, 2147483648
  %v146 = vmul.f32 %v145, 1.442695
  %v147 = vpow.pop %v146
  %v148 = vadd.f32 %v147, 1.0
  %v149 = vrcp.pop %v148
  %v150 = vmul.f32 1.0, %v149
  %v151 = vmul.f32 %v131, %v150
  %v152 = vpack.c.bf16 %v151, %v151
  %v155 = vunpack.c.l.s4 839922192
  %v156 = vunpack.c.0.s8 %v155
  %v157 = vlaneseq
  %v158 = vshrl.u32 %v157, 7
  %v159 = vsub.s32 %v156, %v158
  %v160 = vrot.slane %v144, %v159
  %162 = vst [vmem:[%s2] sm:$0xff] %v160
  %163 = vst [vmem:[%s2 + $0x8] sm:$0xff] %v160
  %164 = vst [vmem:[%s2 + $0x10] sm:$0xff] %v160
  %165 = vst [vmem:[%s2 + $0x18] sm:$0xff] %v160
  %166 = vst [vmem:[%s2 + $0x20] sm:$0xff] %v160
  %167 = vst [vmem:[%s2 + $0x28] sm:$0xff] %v160
  %168 = vst [vmem:[%s2 + $0x30] sm:$0xff] %v160
  %169 = vst [vmem:[%s2 + $0x38] sm:$0xff] %v160
  %170 = vst [vmem:[%s2 + $0x40] sm:$0xff] %v160
  %171 = vst [vmem:[%s2 + $0x48] sm:$0xff] %v160
  %172 = vst [vmem:[%s2 + $0x50] sm:$0xff] %v160
  %173 = vst [vmem:[%s2 + $0x58] sm:$0xff] %v160
  %174 = vst [vmem:[%s2 + $0x60] sm:$0xff] %v160
  %175 = vst [vmem:[%s2 + $0x68] sm:$0xff] %v160
  %176 = vst [vmem:[%s2 + $0x70] sm:$0xff] %v160
  %177 = vst [vmem:[%s2 + $0x78] sm:$0xff] %v160
  %178 = vst [vmem:[%s2 + $0x80] sm:$0xff] %v160
  %179 = vst [vmem:[%s2 + $0x88] sm:$0xff] %v160
  %180 = vst [vmem:[%s2 + $0x90] sm:$0xff] %v160
  %181 = vst [vmem:[%s2 + $0x98] sm:$0xff] %v160
  %vm182 = vcmask 519168
  %183 = vst.msk [vmem:[%s2 + $0xa0] sm:$0xf] %vm182, %v160
  %v185 = vunpack.c.l.b16 %v152
  %v186 = vpack.c.b16 %v185, %v185
  %187 = vrot.lane.b32.xlu0 %v186, 87
  %v188 = vpop.permute.xlu0 %187
  %vm190 = vcmask 790200
  %191 = vst.msk [vmem:[%s2 + $0x44] sm:$0xf] %vm190, %v188
  %192 = vrot.lane.b32.xlu0 %v186, 21
  %v193 = vpop.permute.xlu0 %192
  %vm195 = vcmask 331000
  %196 = vst.msk [vmem:[%s2 + $0x48] sm:$0xf] %vm195, %v193
  %197 = vrot.lane.b32.xlu0 %v186, 83
  %v198 = vpop.permute.xlu0 %197
  %vm200 = vcmask 921400
  %201 = vst.msk [vmem:[%s2 + $0x48] sm:$0xf] %vm200, %v198
  %202 = vrot.lane.b32.xlu0 %v186, 17
  %v203 = vpop.permute.xlu0 %202
  %vm205 = vcmask 462200
  %206 = vst.msk [vmem:[%s2 + $0x4c] sm:$0xf] %vm205, %v203
  %207 = vrot.lane.b32.xlu0 %v186, 79
  %v208 = vpop.permute.xlu0 %207
  %v209 = vrot.slane %v208, 4
  %vm210 = vcmask 646144
  %v211 = vsel %vm210, %v209, %v208
  %vm213 = vcmask 1044408
  %vm214 = vcmask 7172
  %vm215 = vmor %vm214, %vm213
  %216 = vst.msk [vmem:[%s2 + $0x4c] sm:$0xff] %vm215, %v211
  %217 = vrot.lane.b32.xlu0 %v186, 13
  %v218 = vpop.permute.xlu0 %217
  %vm220 = vcmask 593400
  %221 = vst.msk [vmem:[%s2 + $0x50] sm:$0xf] %vm220, %v218
  %222 = vrot.lane.b32.xlu0 %v186, 75
  %v223 = vpop.permute.xlu0 %222
  %vm225 = vcmask 134200
  %226 = vst.msk [vmem:[%s2 + $0x54] sm:$0xf] %vm225, %v223
  %227 = vrot.lane.b32.xlu0 %v186, 9
  %v228 = vpop.permute.xlu0 %227
  %vm230 = vcmask 724600
  %231 = vst.msk [vmem:[%s2 + $0x54] sm:$0xf] %vm230, %v228
  %232 = vrot.lane.b32.xlu0 %v186, 71
  %v233 = vpop.permute.xlu0 %232
  %vm235 = vcmask 265400
  %236 = vst.msk [vmem:[%s2 + $0x58] sm:$0xf] %vm235, %v233
  %237 = vrot.lane.b32.xlu0 %v186, 5
  %v238 = vpop.permute.xlu0 %237
  %vm240 = vcmask 855800
  %241 = vst.msk [vmem:[%s2 + $0x58] sm:$0xf] %vm240, %v238
  %s242 = scalar_lea.vmem %s0, 128
  %v243 = vld [vmem:[%s242] sm:$0xff]
  %v244 = vld [vmem:[%s242 + $0x8] sm:$0xff]
  %v245 = vld [vmem:[%s242 + $0x10] sm:$0xff]
  %v246 = vld [vmem:[%s242 + $0x18] sm:$0xff]
  %v247 = vld [vmem:[%s242 + $0x20] sm:$0xff]
  %v248 = vld [vmem:[%s242 + $0x28] sm:$0xff]
  %v249 = vld [vmem:[%s242 + $0x30] sm:$0xff]
  %v250 = vld [vmem:[%s242 + $0x38] sm:$0xff]
  %v251 = vld [vmem:[%s242 + $0x40] sm:$0xff]
  %v252 = vld [vmem:[%s242 + $0x48] sm:$0xff]
  %v253 = vld [vmem:[%s242 + $0x50] sm:$0xff]
  %v254 = vld [vmem:[%s242 + $0x58] sm:$0xff]
  %v255 = vld [vmem:[%s242 + $0x60] sm:$0xff]
  %v256 = vld [vmem:[%s242 + $0x68] sm:$0xff]
  %v257 = vld [vmem:[%s242 + $0x70] sm:$0xff]
  %v258 = vld [vmem:[%s242 + $0x78] sm:$0xff]
  %259 = vmatprep.subr.mxu0 0.0
  %260 = vmatpush1.msra.mxu0 %v258
  %261 = vmatprep.subr.mxu0 0.0
  %262 = vmatpush1.msra.mxu0 %v257
  %263 = vmatprep.subr.mxu0 0.0
  %264 = vmatpush1.msra.mxu0 %v256
  %265 = vmatprep.subr.mxu0 0.0
  %266 = vmatpush1.msra.mxu0 %v255
  %267 = vmatprep.subr.mxu0 0.0
  %268 = vmatpush1.msra.mxu0 %v254
  %269 = vmatprep.subr.mxu0 0.0
  %270 = vmatpush1.msra.mxu0 %v253
  %271 = vmatprep.subr.mxu0 0.0
  %272 = vmatpush1.msra.mxu0 %v252
  %273 = vmatprep.subr.mxu0 0.0
  %274 = vmatpush1.msra.mxu0 %v251
  %275 = vmatprep.subr.mxu0 0.0
  %276 = vmatpush1.msra.mxu0 %v250
  %277 = vmatprep.subr.mxu0 0.0
  %278 = vmatpush1.msra.mxu0 %v249
  %279 = vmatprep.subr.mxu0 0.0
  %280 = vmatpush1.msra.mxu0 %v248
  %281 = vmatprep.subr.mxu0 0.0
  %282 = vmatpush1.msra.mxu0 %v247
  %283 = vmatprep.subr.mxu0 0.0
  %284 = vmatpush1.msra.mxu0 %v246
  %285 = vmatprep.subr.mxu0 0.0
  %286 = vmatpush1.msra.mxu0 %v245
  %287 = vmatprep.subr.mxu0 0.0
  %288 = vmatpush1.msra.mxu0 %v244
  %289 = vmatprep.subr.mxu0 0.0
  %290 = vmatpush1.msra.mxu0 %v243
  %291 = vmatprep.subr.mxu0 0.0
  %292 = vmatpush2.msra.mxu0 0.0
  %293 = vmatprep.subr.mxu0 0.0
  %294 = vmatpush2.msra.mxu0 0.0
  %295 = vmatprep.subr.mxu0 0.0
  %296 = vmatpush2.msra.mxu0 0.0
  %297 = vmatprep.subr.mxu0 0.0
  %298 = vmatpush2.msra.mxu0 0.0
  %299 = vmatprep.subr.mxu0 0.0
  %300 = vmatpush2.msra.mxu0 0.0
  %301 = vmatprep.subr.mxu0 0.0
  %302 = vmatpush2.msra.mxu0 0.0
  %303 = vmatprep.subr.mxu0 0.0
  %304 = vmatpush2.msra.mxu0 0.0
  %305 = vmatprep.subr.mxu0 0.0
  %306 = vmatpush2.msra.mxu0 0.0
  %307 = vmatprep.subr.mxu0 0.0
  %308 = vmatpush2.msra.mxu0 0.0
  %309 = vmatprep.subr.mxu0 0.0
  %310 = vmatpush2.msra.mxu0 0.0
  %311 = vmatprep.subr.mxu0 0.0
  %312 = vmatpush2.msra.mxu0 0.0
  %313 = vmatprep.subr.mxu0 0.0
  %314 = vmatpush2.msra.mxu0 0.0
  %315 = vmatprep.subr.mxu0 0.0
  %316 = vmatpush2.msra.mxu0 0.0
  %317 = vmatprep.subr.mxu0 0.0
  %318 = vmatpush2.msra.mxu0 0.0
  %319 = vmatprep.subr.mxu0 0.0
  %320 = vmatpush2.msra.mxu0 0.0
  %321 = vmatprep.subr.mxu0 0.0
  %322 = vmatpush2.msra.mxu0 0.0
  %323 = vmatprep.mubr.f32.mxu0 0.0
  %324 = vmatmul.mubr.f32.gmra.mxu0 %v11
  %v325 = vpop.f32.mrf.mxu0
  %v326 = vadd.f32 0.0, %v325
  %v327 = vpop.f32.mrf.mxu0
  %328 = vmatprep.mubr.f32.mxu0 0.0
  %329 = vmatmul.mubr.f32.gmra.mxu0 %v12
  %v330 = vpop.f32.mrf.mxu0
  %v331 = vadd.f32 0.0, %v330
  %v332 = vpop.f32.mrf.mxu0
  %333 = vdwg.mxu0
  %334 = vadd.xlane.f32.xlu0 %v326
  %v335 = vpop.xlane.xlu0 %334
  %336 = vadd.xlane.f32.xlu0 %v331
  %v337 = vpop.xlane.xlu0 %336
  %v338 = vmul.f32 %v335, %v108
  %v339 = vmul.f32 %v337, %v108
  %v340 = vsub.f32 %v326, %v338
  %v341 = vsub.f32 %v331, %v339
  %v342 = vmul.f32 %v340, %v340
  %v343 = vmul.f32 %v341, %v341
  %344 = vadd.xlane.f32.xlu0 %v342
  %v345 = vpop.xlane.xlu0 %344
  %346 = vadd.xlane.f32.xlu0 %v343
  %v347 = vpop.xlane.xlu0 %346
  %v348 = vmul.f32 %v338, 5056.0
  %v349 = vmul.f32 %v339, 5056.0
  %v350 = vmul.f32 %v348, %v338
  %v351 = vmul.f32 %v349, %v339
  %v352 = vadd.f32 %v345, %v350
  %v353 = vadd.f32 %v347, %v351
  %v354 = vmul.f32 %v352, %v108
  %v355 = vmul.f32 %v353, %v108
  %v356 = vadd.f32 %v354, 1e-05
  %v357 = vadd.f32 %v355, 1e-05
  %v358 = vrsqrt.pop %v356
  %v359 = vrsqrt.pop %v357
  %v360 = vmul.f32 %v340, %v358
  %v361 = vmul.f32 %v341, %v359
  %v362 = vsub.f32 0.0, %v338
  %v363 = vsub.f32 0.0, %v339
  %v364 = vmul.f32 %v362, %v358
  %v365 = vmul.f32 %v363, %v359
  %v366 = vxor.u32 %v365, 2147483648
  %v367 = vmul.f32 %v366, 1.442695
  %v368 = vpow.pop %v367
  %v369 = vadd.f32 %v368, 1.0
  %v370 = vrcp.pop %v369
  %v371 = vmul.f32 1.0, %v370
  %v372 = vmul.f32 %v364, %v371
  %v373 = vpack.c.bf16 %v372, %v372
  %v374 = vxor.u32 %v361, 2147483648
  %v375 = vmul.f32 %v374, 1.442695
  %v376 = vpow.pop %v375
  %v377 = vadd.f32 %v376, 1.0
  %v378 = vrcp.pop %v377
  %v379 = vmul.f32 1.0, %v378
  %v380 = vmul.f32 %v360, %v379
  %v381 = vpack.c.bf16 %v380, %v380
  %v384 = vunpack.c.l.s4 839922192
  %v385 = vunpack.c.0.s8 %v384
  %v386 = vlaneseq
  %v387 = vshrl.u32 %v386, 7
  %v388 = vsub.s32 %v385, %v387
  %v389 = vrot.slane %v373, %v388
  %s391 = scalar_lea.vmem %s2, 164
  %392 = vst [vmem:[%s391] sm:$0xff] %v389
  %393 = vst [vmem:[%s391 + $0x8] sm:$0xff] %v389
  %394 = vst [vmem:[%s391 + $0x10] sm:$0xff] %v389
  %395 = vst [vmem:[%s391 + $0x18] sm:$0xff] %v389
  %396 = vst [vmem:[%s391 + $0x20] sm:$0xff] %v389
  %397 = vst [vmem:[%s391 + $0x28] sm:$0xff] %v389
  %398 = vst [vmem:[%s391 + $0x30] sm:$0xff] %v389
  %399 = vst [vmem:[%s391 + $0x38] sm:$0xff] %v389
  %400 = vst [vmem:[%s391 + $0x40] sm:$0xff] %v389
  %401 = vst [vmem:[%s391 + $0x48] sm:$0xff] %v389
  %402 = vst [vmem:[%s391 + $0x50] sm:$0xff] %v389
  %403 = vst [vmem:[%s391 + $0x58] sm:$0xff] %v389
  %404 = vst [vmem:[%s391 + $0x60] sm:$0xff] %v389
  %405 = vst [vmem:[%s391 + $0x68] sm:$0xff] %v389
  %406 = vst [vmem:[%s391 + $0x70] sm:$0xff] %v389
  %407 = vst [vmem:[%s391 + $0x78] sm:$0xff] %v389
  %408 = vst [vmem:[%s391 + $0x80] sm:$0xff] %v389
  %409 = vst [vmem:[%s391 + $0x88] sm:$0xff] %v389
  %410 = vst [vmem:[%s391 + $0x90] sm:$0xff] %v389
  %411 = vst [vmem:[%s391 + $0x98] sm:$0xff] %v389
  %412 = vst.msk [vmem:[%s391 + $0xa0] sm:$0xf] %vm182, %v389
  %v414 = vunpack.c.l.b16 %v381
  %v415 = vpack.c.b16 %v414, %v414
  %416 = vrot.lane.b32.xlu0 %v415, 87
  %v417 = vpop.permute.xlu0 %416
  %419 = vst.msk [vmem:[%s391 + $0x44] sm:$0xf] %vm190, %v417
  %420 = vrot.lane.b32.xlu0 %v415, 21
  %v421 = vpop.permute.xlu0 %420
  %423 = vst.msk [vmem:[%s391 + $0x48] sm:$0xf] %vm195, %v421
  %424 = vrot.lane.b32.xlu0 %v415, 83
  %v425 = vpop.permute.xlu0 %424
  %427 = vst.msk [vmem:[%s391 + $0x48] sm:$0xf] %vm200, %v425
  %428 = vrot.lane.b32.xlu0 %v415, 17
  %v429 = vpop.permute.xlu0 %428
  %431 = vst.msk [vmem:[%s391 + $0x4c] sm:$0xf] %vm205, %v429
  %432 = vrot.lane.b32.xlu0 %v415, 79
  %v433 = vpop.permute.xlu0 %432
  %v434 = vrot.slane %v433, 4
  %v435 = vsel %vm210, %v434, %v433
  %437 = vst.msk [vmem:[%s391 + $0x4c] sm:$0xff] %vm215, %v435
  %438 = vrot.lane.b32.xlu0 %v415, 13
  %v439 = vpop.permute.xlu0 %438
  %441 = vst.msk [vmem:[%s391 + $0x50] sm:$0xf] %vm220, %v439
  %442 = vrot.lane.b32.xlu0 %v415, 75
  %v443 = vpop.permute.xlu0 %442
  %445 = vst.msk [vmem:[%s391 + $0x54] sm:$0xf] %vm225, %v443
  %446 = vrot.lane.b32.xlu0 %v415, 9
  %v447 = vpop.permute.xlu0 %446
  %449 = vst.msk [vmem:[%s391 + $0x54] sm:$0xf] %vm230, %v447
  %450 = vrot.lane.b32.xlu0 %v415, 71
  %v451 = vpop.permute.xlu0 %450
  %453 = vst.msk [vmem:[%s391 + $0x58] sm:$0xf] %vm235, %v451
  %454 = vrot.lane.b32.xlu0 %v415, 5
  %v455 = vpop.permute.xlu0 %454
  %457 = vst.msk [vmem:[%s391 + $0x58] sm:$0xf] %vm240, %v455
  // Predicated region
  $region10: #{downsample_block.1} parent=0 // pred_check
    _
  $region11: #{downsample_block.1} parent=0 // pred_check_branch
    %459 = sbr.rel (0) target = $region13
  $region12: #{downsample_block.1} parent=0 // pred_region
    _
  $region13: #{downsample_block.1} parent=0 // pred_fallthru
    _
  // Predicated region
  $region14: #{downsample_block.1} parent=0 // pred_check
    _
  $region15: #{downsample_block.1} parent=0 // pred_check_branch
    %461 = sbr.rel (0) target = $region17
  $region16: #{downsample_block.1} parent=0 // pred_region
    _
  $region17: #{downsample_block.1} parent=0 // pred_fallthru
    _

</llo_original>
